<compile_context>
chip_gen: v5e
topology: v5e:2x2
jax: 0.10.0
libtpu: 0.0.40
codegen_flags: <defaults>
</compile_context>

<pallas_src>
import functools

import jax
import jax.numpy as jnp
from jax.experimental import pallas as pl
from jax.experimental.pallas import tpu as pltpu


# --------------------------------------------------------------------- fused forward kernel
def _vgae_fused_kernel(a_ref, x_ref, w1_ref, wml_ref, wdec_ref, idx_ref, eps_ref, o_ref,
                       *, n, h, b):
    f32 = jnp.float32
    bf16 = jnp.bfloat16

    # ---- encoder stage 1: h = relu(A @ X @ W1)  (bf16 operands, f32 accumulation) ----
    a_bf = a_ref[...].astype(bf16)
    ax = jnp.dot(a_bf, x_ref[...].astype(bf16), preferred_element_type=f32)        # (N, F)
    hidden = jnp.maximum(
        jnp.dot(ax.astype(bf16), w1_ref[...].astype(bf16), preferred_element_type=f32), 0.0
    )                                                                               # (N, H1)

    # ---- encoder stage 2: shared A@h, fused [mean | logstd] projection (lane-dense 2H) ----
    ah = jnp.dot(a_bf, hidden.astype(bf16), preferred_element_type=f32)             # (N, H1)
    ml = jnp.dot(ah.astype(bf16), wml_ref[...].astype(bf16),
                 preferred_element_type=f32)                                        # (N, 2H)
    mean = ml[:, :h]                                                                # (N, H)
    logstd = ml[:, h:]                                                              # (N, H)

    # ---- reparameterization: x = mean + exp(logstd) * eps ----
    z = mean + jnp.exp(logstd) * eps_ref[...]                                       # (N, H)

    # ---- in-kernel gather x[users], x[items], x[neg_items] via one-hot matmul (MXU) ----
    idx = idx_ref[...]                                                              # (3B, 1) int32
    col = jax.lax.broadcasted_iota(jnp.int32, (3 * b, n), 1)
    onehot = (col == idx).astype(f32)                                               # (3B, N)
    e = jnp.dot(onehot, z, preferred_element_type=f32)                              # (3B, H)
    eu = e[0 * b:1 * b]
    ei = e[1 * b:2 * b]
    en = e[2 * b:3 * b]

    # ---- decoder scores: Linear_{H->1}(e_u * e_i)  (bias cancels in neg - pos, omitted) ----
    w = wdec_ref[...]                                                               # (1, H)
    pos = jnp.sum(eu * ei * w, axis=-1, keepdims=True)                              # (B, 1)
    neg = jnp.sum(eu * en * w, axis=-1, keepdims=True)                              # (B, 1)

    # BPR: -mean(logsigmoid(pos - neg)) == mean(softplus(neg - pos)), stable form
    d = neg - pos
    bpr = jnp.mean(jnp.maximum(d, 0.0) + jnp.log(1.0 + jnp.exp(-jnp.abs(d))))

    # KL(q(z|x) || N(0, I)) averaged over nodes
    kl = -0.5 * jnp.mean(
        jnp.sum(1.0 + 2.0 * logstd - mean * mean - jnp.exp(2.0 * logstd),
                axis=-1, keepdims=True)
    )

    o_ref[...] = jnp.reshape(bpr + kl, (1, 1))


# ------------------------------------------------------------------------------- full forward
def vgae_forward(params, adj_norm, feats, users, items, neg_items, eps):
    n, f = feats.shape
    h = params["w_mu"].shape[1]
    b = users.shape[0]

    # glue: concat the two projection weights (single lane-dense matmul in-kernel),
    # pack the three index vectors into one (3B, 1) int32 slab for the in-kernel gather.
    w_mu_ls = jnp.concatenate([params["w_mu"], params["w_ls"]], axis=1)             # (H1, 2H)
    idx = jnp.concatenate([users, items, neg_items]).astype(jnp.int32).reshape(3 * b, 1)

    vmem = pl.BlockSpec(memory_space=pltpu.MemorySpace.VMEM)
    out = pl.pallas_call(
        functools.partial(_vgae_fused_kernel, n=n, h=h, b=b),
        out_shape=jax.ShapeDtypeStruct((1, 1), jnp.float32),
        in_specs=[vmem] * 7,
        out_specs=vmem,
    )(adj_norm, feats, params["w1"], w_mu_ls, params["w_dec"], idx, eps)
    return out[0, 0]


# --------------------------------------------------------------------------------------- main
if __name__ == "__main__":
    N, F, H1, H, B = 64, 32, 32, 16, 8

    key = jax.random.PRNGKey(0)
    k_adj, k_x, k_w1, k_mu, k_ls, k_dec, k_eps, k_idx = jax.random.split(key, 8)

    # deterministic synthetic graph: random symmetric adjacency, symmetrically normalized
    a_raw = (jax.random.uniform(k_adj, (N, N)) < 0.1).astype(jnp.float32)
    a_sym = jnp.maximum(a_raw, a_raw.T) + jnp.eye(N, dtype=jnp.float32)
    deg = jnp.sum(a_sym, axis=-1)
    d_inv_sqrt = 1.0 / jnp.sqrt(deg)
    adj_norm = a_sym * d_inv_sqrt[:, None] * d_inv_sqrt[None, :]

    feats = jax.random.normal(k_x, (N, F), dtype=jnp.float32)

    params = {
        "w1":    jax.random.normal(k_w1, (F, H1), dtype=jnp.float32) * 0.1,
        "w_mu":  jax.random.normal(k_mu, (H1, H), dtype=jnp.float32) * 0.1,
        "w_ls":  jax.random.normal(k_ls, (H1, H), dtype=jnp.float32) * 0.1,
        "w_dec": jax.random.normal(k_dec, (1, H), dtype=jnp.float32) * 0.1,  # Linear(H->1), row form
        # decoder bias intentionally omitted: it cancels exactly in (neg - pos) and has no
        # effect on the BPR loss.
    }

    eps = jax.random.normal(k_eps, (N, H), dtype=jnp.float32)

    idx = jax.random.randint(k_idx, (3, B), 0, N, dtype=jnp.int32)
    users, items, neg_items = idx[0], idx[1], idx[2]

    loss = jax.jit(vgae_forward)(params, adj_norm, feats, users, items, neg_items, eps)
    jax.block_until_ready(loss)
    assert loss.shape == () and jnp.isfinite(loss)
    print("KERNEL_OK")
</pallas_src>

<mosaic_0001>
module attributes {stable_mosaic.version = 11 : i64} {
  func.func @_vgae_fused_kernel(%arg0: memref<64x64xf32, #tpu.memory_space<vmem>>, %arg1: memref<64x32xf32, #tpu.memory_space<vmem>>, %arg2: memref<32x32xf32, #tpu.memory_space<vmem>>, %arg3: memref<32x32xf32, #tpu.memory_space<vmem>>, %arg4: memref<1x16xf32, #tpu.memory_space<vmem>>, %arg5: memref<24x1xi32, #tpu.memory_space<vmem>>, %arg6: memref<64x16xf32, #tpu.memory_space<vmem>>, %arg7: memref<1x1xf32, #tpu.memory_space<vmem>>) attributes {dimension_semantics = [], scalar_prefetch = 0 : i64, scratch_operands = 0 : i64, tpu.core_type = #tpu.core_type<tc>} {
    %c0 = arith.constant 0 : index
    %c0_0 = arith.constant 0 : index
    %0 = vector.load %arg0[%c0, %c0_0] : memref<64x64xf32, #tpu.memory_space<vmem>>, vector<64x64xf32>
    %1 = arith.truncf %0 : vector<64x64xf32> to vector<64x64xbf16>
    %c0_1 = arith.constant 0 : index
    %c0_2 = arith.constant 0 : index
    %2 = vector.load %arg1[%c0_1, %c0_2] : memref<64x32xf32, #tpu.memory_space<vmem>>, vector<64x32xf32>
    %3 = arith.truncf %2 : vector<64x32xf32> to vector<64x32xbf16>
    %cst = arith.constant dense<0.000000e+00> : vector<64x32xf32>
    %4 = tpu.matmul %1, %3, %cst {dimension_numbers = #tpu.dot_dimension_numbers<[1], [0], [0], [1], [0, 0, 1, 1], [], []>} : vector<64x64xbf16>, vector<64x32xbf16>, vector<64x32xf32> -> vector<64x32xf32>
    %5 = arith.truncf %4 : vector<64x32xf32> to vector<64x32xbf16>
    %c0_3 = arith.constant 0 : index
    %c0_4 = arith.constant 0 : index
    %6 = vector.load %arg2[%c0_3, %c0_4] : memref<32x32xf32, #tpu.memory_space<vmem>>, vector<32x32xf32>
    %7 = arith.truncf %6 : vector<32x32xf32> to vector<32x32xbf16>
    %cst_5 = arith.constant dense<0.000000e+00> : vector<64x32xf32>
    %8 = tpu.matmul %5, %7, %cst_5 {dimension_numbers = #tpu.dot_dimension_numbers<[1], [0], [0], [1], [0, 0, 1, 1], [], []>} : vector<64x32xbf16>, vector<32x32xbf16>, vector<64x32xf32> -> vector<64x32xf32>
    %cst_6 = arith.constant 0.000000e+00 : f32
    %9 = vector.broadcast %cst_6 : f32 to vector<64x32xf32>
    %10 = arith.maximumf %8, %9 : vector<64x32xf32>
    %11 = arith.truncf %10 : vector<64x32xf32> to vector<64x32xbf16>
    %cst_7 = arith.constant dense<0.000000e+00> : vector<64x32xf32>
    %12 = tpu.matmul %1, %11, %cst_7 {dimension_numbers = #tpu.dot_dimension_numbers<[1], [0], [0], [1], [0, 0, 1, 1], [], []>} : vector<64x64xbf16>, vector<64x32xbf16>, vector<64x32xf32> -> vector<64x32xf32>
    %13 = arith.truncf %12 : vector<64x32xf32> to vector<64x32xbf16>
    %c0_8 = arith.constant 0 : index
    %c0_9 = arith.constant 0 : index
    %14 = vector.load %arg3[%c0_8, %c0_9] : memref<32x32xf32, #tpu.memory_space<vmem>>, vector<32x32xf32>
    %15 = arith.truncf %14 : vector<32x32xf32> to vector<32x32xbf16>
    %cst_10 = arith.constant dense<0.000000e+00> : vector<64x32xf32>
    %16 = tpu.matmul %13, %15, %cst_10 {dimension_numbers = #tpu.dot_dimension_numbers<[1], [0], [0], [1], [0, 0, 1, 1], [], []>} : vector<64x32xbf16>, vector<32x32xbf16>, vector<64x32xf32> -> vector<64x32xf32>
    %17 = vector.extract_strided_slice %16 {offsets = [0, 0], sizes = [64, 16], strides = [1, 1]} : vector<64x32xf32> to vector<64x16xf32>
    %18 = vector.extract_strided_slice %16 {offsets = [0, 16], sizes = [64, 16], strides = [1, 1]} : vector<64x32xf32> to vector<64x16xf32>
    %19 = math.exp %18 : vector<64x16xf32>
    %c0_11 = arith.constant 0 : index
    %c0_12 = arith.constant 0 : index
    %20 = vector.load %arg6[%c0_11, %c0_12] : memref<64x16xf32, #tpu.memory_space<vmem>>, vector<64x16xf32>
    %21 = arith.mulf %19, %20 : vector<64x16xf32>
    %22 = arith.addf %17, %21 : vector<64x16xf32>
    %c0_13 = arith.constant 0 : index
    %c0_14 = arith.constant 0 : index
    %23 = vector.load %arg5[%c0_13, %c0_14] : memref<24x1xi32, #tpu.memory_space<vmem>>, vector<24x1xi32>
    %24 = tpu.iota {dimensions = array<i32: 1>} : vector<24x64xi32>
    %25 = vector.broadcast %23 : vector<24x1xi32> to vector<24x64xi32>
    %26 = arith.cmpi eq, %24, %25 : vector<24x64xi32>
    %27 = arith.extui %26 : vector<24x64xi1> to vector<24x64xi32>
    %28 = arith.sitofp %27 : vector<24x64xi32> to vector<24x64xf32>
    %cst_15 = arith.constant dense<0.000000e+00> : vector<24x16xf32>
    %29 = tpu.matmul %28, %22, %cst_15 {dimension_numbers = #tpu.dot_dimension_numbers<[1], [0], [0], [1], [0, 0, 1, 1], [], []>} : vector<24x64xf32>, vector<64x16xf32>, vector<24x16xf32> -> vector<24x16xf32>
    %30 = vector.extract_strided_slice %29 {offsets = [0, 0], sizes = [8, 16], strides = [1, 1]} : vector<24x16xf32> to vector<8x16xf32>
    %31 = vector.extract_strided_slice %29 {offsets = [8, 0], sizes = [8, 16], strides = [1, 1]} : vector<24x16xf32> to vector<8x16xf32>
    %32 = vector.extract_strided_slice %29 {offsets = [16, 0], sizes = [8, 16], strides = [1, 1]} : vector<24x16xf32> to vector<8x16xf32>
    %c0_16 = arith.constant 0 : index
    %c0_17 = arith.constant 0 : index
    %33 = vector.load %arg4[%c0_16, %c0_17] : memref<1x16xf32, #tpu.memory_space<vmem>>, vector<1x16xf32>
    %34 = arith.mulf %30, %31 : vector<8x16xf32>
    %35 = vector.broadcast %33 : vector<1x16xf32> to vector<8x16xf32>
    %36 = arith.mulf %34, %35 : vector<8x16xf32>
    %cst_18 = arith.constant dense<0.000000e+00> : vector<8xf32>
    %37 = vector.multi_reduction <add>, %36, %cst_18 [1] : vector<8x16xf32> to vector<8xf32>
    %38 = vector.shape_cast %37 : vector<8xf32> to vector<8x1xf32>
    %39 = arith.mulf %30, %32 : vector<8x16xf32>
    %40 = vector.broadcast %33 : vector<1x16xf32> to vector<8x16xf32>
    %41 = arith.mulf %39, %40 : vector<8x16xf32>
    %cst_19 = arith.constant dense<0.000000e+00> : vector<8xf32>
    %42 = vector.multi_reduction <add>, %41, %cst_19 [1] : vector<8x16xf32> to vector<8xf32>
    %43 = vector.shape_cast %42 : vector<8xf32> to vector<8x1xf32>
    %44 = arith.subf %43, %38 : vector<8x1xf32>
    %cst_20 = arith.constant 0.000000e+00 : f32
    %45 = vector.broadcast %cst_20 : f32 to vector<8x1xf32>
    %46 = arith.maximumf %44, %45 : vector<8x1xf32>
    %47 = math.absf %44 : vector<8x1xf32>
    %cst_21 = arith.constant 0.000000e+00 : f32
    %48 = vector.broadcast %cst_21 : f32 to vector<8x1xf32>
    %49 = arith.subf %48, %47 : vector<8x1xf32>
    %50 = math.exp %49 : vector<8x1xf32>
    %cst_22 = arith.constant 1.000000e+00 : f32
    %51 = vector.broadcast %cst_22 : f32 to vector<8x1xf32>
    %52 = arith.addf %51, %50 : vector<8x1xf32>
    %53 = math.log %52 : vector<8x1xf32>
    %54 = arith.addf %46, %53 : vector<8x1xf32>
    %55 = vector.shape_cast %54 : vector<8x1xf32> to vector<1x8x1xf32>
    %cst_23 = arith.constant dense<0.000000e+00> : vector<1xf32>
    %56 = vector.multi_reduction <add>, %55, %cst_23 [1, 2] : vector<1x8x1xf32> to vector<1xf32>
    %57 = vector.shape_cast %56 : vector<1xf32> to vector<1x1x1xf32>
    %58 = vector.extract %57[0, 0, 0] : f32 from vector<1x1x1xf32>
    %cst_24 = arith.constant 8.000000e+00 : f32
    %59 = arith.divf %58, %cst_24 : f32
    %cst_25 = arith.constant 2.000000e+00 : f32
    %60 = vector.broadcast %cst_25 : f32 to vector<64x16xf32>
    %61 = arith.mulf %60, %18 : vector<64x16xf32>
    %cst_26 = arith.constant 1.000000e+00 : f32
    %62 = vector.broadcast %cst_26 : f32 to vector<64x16xf32>
    %63 = arith.addf %62, %61 : vector<64x16xf32>
    %64 = arith.mulf %17, %17 : vector<64x16xf32>
    %65 = arith.subf %63, %64 : vector<64x16xf32>
    %cst_27 = arith.constant 2.000000e+00 : f32
    %66 = vector.broadcast %cst_27 : f32 to vector<64x16xf32>
    %67 = arith.mulf %66, %18 : vector<64x16xf32>
    %68 = math.exp %67 : vector<64x16xf32>
    %69 = arith.subf %65, %68 : vector<64x16xf32>
    %cst_28 = arith.constant dense<0.000000e+00> : vector<64xf32>
    %70 = vector.multi_reduction <add>, %69, %cst_28 [1] : vector<64x16xf32> to vector<64xf32>
    %71 = vector.shape_cast %70 : vector<64xf32> to vector<64x1xf32>
    %72 = vector.shape_cast %71 : vector<64x1xf32> to vector<1x64x1xf32>
    %cst_29 = arith.constant dense<0.000000e+00> : vector<1xf32>
    %73 = vector.multi_reduction <add>, %72, %cst_29 [1, 2] : vector<1x64x1xf32> to vector<1xf32>
    %74 = vector.shape_cast %73 : vector<1xf32> to vector<1x1x1xf32>
    %75 = vector.extract %74[0, 0, 0] : f32 from vector<1x1x1xf32>
    %cst_30 = arith.constant 6.400000e+01 : f32
    %76 = arith.divf %75, %cst_30 : f32
    %cst_31 = arith.constant -5.000000e-01 : f32
    %77 = arith.mulf %cst_31, %76 : f32
    %78 = arith.addf %59, %77 : f32
    %79 = vector.broadcast %78 : f32 to vector<1x1xf32>
    %c0_32 = arith.constant 0 : index
    %c0_33 = arith.constant 0 : index
    %80 = vector.load %arg7[%c0_32, %c0_33] : memref<1x1xf32, #tpu.memory_space<vmem>>, vector<1x1xf32>
    tpu.vector_store %arg7[%c0_32, %c0_33], %79 {strides = array<i32>} : memref<1x1xf32, #tpu.memory_space<vmem>>, vector<1x1xf32>,
    return
  }
}

</mosaic_0001>

<llo_original>
// kernel: vgae_forward.1
$region0: #{vgae_forward.1}
  #allocation0 [shape = 'u32[]', space=smem, size = 0x4, offset = 0x4, fixed_abs, tag = 'smem constant byte address 0x4 - core index']
  #allocation1 [shape = 'u32[72,128]{1,0:T(1,128)}', space=vmem, size = 0x9000, scoped, tag = 'internal scratch']
  %s0 = inlined_call_operand.vmem [shape: f32[64,64], index: 0, kind: input, shape index: {}]
  %s1 = inlined_call_operand.vmem [shape: f32[64,32], index: 1, kind: input, shape index: {}]
  %s2 = inlined_call_operand.vmem [shape: f32[32,32], index: 2, kind: input, shape index: {}]
  %s3 = inlined_call_operand.vmem [shape: f32[32,32], index: 3, kind: input, shape index: {}]
  %s4 = inlined_call_operand.vmem [shape: f32[1,16], index: 4, kind: input, shape index: {}]
  %s5 = inlined_call_operand.vmem [shape: s32[24,1], index: 5, kind: input, shape index: {}]
  %s6 = inlined_call_operand.vmem [shape: f32[64,16], index: 6, kind: input, shape index: {}]
  %s7 = inlined_call_operand.hbm [shape: f32[1,1], index: 7, kind: output, shape index: {}]
  %s8 = sld [smem:[#allocation0]]
  $region38: #{vgae_forward.1} parent=0
    _
  %s10 = ssub.s32 1, %s8
  %s11 = scalar_select 0, %s10, %s8
  $region1: #{vgae_forward.1} parent=0
    #allocation2 [shape = 'u8[512]{0}', space=vmem, size = 0x400, scoped, tag = 'output window, operand 0, single buffered']
    #allocation3 [shape = 's32[1]{0}', space=sflag, size = 0x4, scoped, tag = 'scoped memory for vgae_forward.1']
    %12 = vsyncpa [#allocation3], 0
    // Predicated region
    $region2: #{vgae_forward.1} parent=1 // pred_check
      _
    $region3: #{vgae_forward.1} parent=1 // pred_check_branch
      %14 = sbr.rel (0) target = $region5
    $region4: #{vgae_forward.1} parent=1 // pred_region
      _
    $region5: #{vgae_forward.1} parent=1 // pred_fallthru
      _
    // Predicated region
    $region6: #{vgae_forward.1} parent=1 // pred_check
      _
    $region7: #{vgae_forward.1} parent=1 // pred_check_branch
      %16 = sbr.rel (0) target = $region9
    $region8: #{vgae_forward.1} parent=1 // pred_region
      _
    $region9: #{vgae_forward.1} parent=1 // pred_fallthru
      _
    // Predicated region
    $region10: #{vgae_forward.1} parent=1 // pred_check
      _
    $region11: #{vgae_forward.1} parent=1 // pred_check_branch
      %18 = sbr.rel (0) target = $region13
    $region12: #{vgae_forward.1} parent=1 // pred_region
      _
    $region13: #{vgae_forward.1} parent=1 // pred_fallthru
      _
    // Predicated region
    $region14: #{vgae_forward.1} parent=1 // pred_check
      _
    $region15: #{vgae_forward.1} parent=1 // pred_check_branch
      %20 = sbr.rel (0) target = $region17
    $region16: #{vgae_forward.1} parent=1 // pred_region
      _
    $region17: #{vgae_forward.1} parent=1 // pred_fallthru
      _
    // Predicated region
    $region18: #{vgae_forward.1} parent=1 // pred_check
      _
    $region19: #{vgae_forward.1} parent=1 // pred_check_branch
      %22 = sbr.rel (0) target = $region21
    $region20: #{vgae_forward.1} parent=1 // pred_region
      _
    $region21: #{vgae_forward.1} parent=1 // pred_fallthru
      _
    // Predicated region
    $region22: #{vgae_forward.1} parent=1 // pred_check
      _
    $region23: #{vgae_forward.1} parent=1 // pred_check_branch
      %24 = sbr.rel (0) target = $region25
    $region24: #{vgae_forward.1} parent=1 // pred_region
      _
    $region25: #{vgae_forward.1} parent=1 // pred_fallthru
      _
    // Predicated region
    $region26: #{vgae_forward.1} parent=1 // pred_check
      _
    $region27: #{vgae_forward.1} parent=1 // pred_check_branch
      %26 = sbr.rel (0) target = $region29
    $region28: #{vgae_forward.1} parent=1 // pred_region
      _
    $region29: #{vgae_forward.1} parent=1 // pred_fallthru
      _
    %v28 = vld [vmem:[%s0] sm:$0xff]
    %v29 = vld [vmem:[%s0 + $0x8] sm:$0xff]
    %v30 = vld [vmem:[%s0 + $0x10] sm:$0xff]
    %v31 = vld [vmem:[%s0 + $0x18] sm:$0xff]
    %v32 = vld [vmem:[%s0 + $0x20] sm:$0xff]
    %v33 = vld [vmem:[%s0 + $0x28] sm:$0xff]
    %v34 = vld [vmem:[%s0 + $0x30] sm:$0xff]
    %v35 = vld [vmem:[%s0 + $0x38] sm:$0xff]
    %v36 = vpack.c.bf16 %v29, %v28
    %v37 = vpack.c.bf16 %v31, %v30
    %v38 = vpack.c.bf16 %v33, %v32
    %v39 = vpack.c.bf16 %v35, %v34
    %v40 = vld [vmem:[%s1] sm:$0xff]
    %v41 = vld [vmem:[%s1 + $0x8] sm:$0xff]
    %v42 = vld [vmem:[%s1 + $0x10] sm:$0xff]
    %v43 = vld [vmem:[%s1 + $0x18] sm:$0xff]
    %v44 = vld [vmem:[%s1 + $0x20] sm:$0xff]
    %v45 = vld [vmem:[%s1 + $0x28] sm:$0xff]
    %v46 = vld [vmem:[%s1 + $0x30] sm:$0xff]
    %v47 = vld [vmem:[%s1 + $0x38] sm:$0xff]
    %v48 = vpack.c.bf16 %v41, %v40
    %v49 = vpack.c.bf16 %v43, %v42
    %v50 = vpack.c.bf16 %v45, %v44
    %v51 = vpack.c.bf16 %v47, %v46
    %vm52 = vcmask 523264
    %v54 = vsel %vm52, %v36, 0
    %v57 = vsel %vm52, %v37, 0
    %v60 = vsel %vm52, %v38, 0
    %v63 = vsel %vm52, %v39, 0
    %65 = vmatpush.bf16.msra.mxu0 0
    %66 = vmatpush.bf16.msra.mxu0 0
    %67 = vmatpush.bf16.msra.mxu0 0
    %68 = vmatpush.bf16.msra.mxu0 0
    %69 = vmatpush.bf16.msra.mxu0 %v51
    %70 = vmatpush.bf16.msra.mxu0 %v50
    %71 = vmatpush.bf16.msra.mxu0 %v49
    %72 = vmatpush.bf16.msra.mxu0 %v48
    %73 = vmatmul.bf16.gmra.mxu0 %v54
    %v74 = vpop.f32.mrf.mxu0
    %v75 = vadd.f32 0.0, %v74
    %v76 = vpop.f32.mrf.mxu0
    %v77 = vadd.f32 0.0, %v76
    %78 = vmatmul.bf16.gmra.mxu0 %v57
    %v79 = vpop.f32.mrf.mxu0
    %v80 = vadd.f32 0.0, %v79
    %v81 = vpop.f32.mrf.mxu0
    %v82 = vadd.f32 0.0, %v81
    %83 = vmatmul.bf16.gmra.mxu0 %v60
    %v84 = vpop.f32.mrf.mxu0
    %v85 = vadd.f32 0.0, %v84
    %v86 = vpop.f32.mrf.mxu0
    %v87 = vadd.f32 0.0, %v86
    %88 = vmatmul.bf16.gmra.mxu0 %v63
    %v89 = vpop.f32.mrf.mxu0
    %v90 = vadd.f32 0.0, %v89
    %v91 = vpop.f32.mrf.mxu0
    %v92 = vadd.f32 0.0, %v91
    %93 = vdwg.mxu0
    %v94 = vpack.c.bf16 %v77, %v75
    %v95 = vpack.c.bf16 %v82, %v80
    %v96 = vpack.c.bf16 %v87, %v85
    %v97 = vpack.c.bf16 %v92, %v90
    %v98 = vld [vmem:[%s2] sm:$0xff]
    %v99 = vld [vmem:[%s2 + $0x8] sm:$0xff]
    %v100 = vld [vmem:[%s2 + $0x10] sm:$0xff]
    %v101 = vld [vmem:[%s2 + $0x18] sm:$0xff]
    %v102 = vpack.c.bf16 %v99, %v98
    %v103 = vpack.c.bf16 %v101, %v100
    %vm104 = vcmask 261120
    %v106 = vsel %vm104, %v94, 0
    %v109 = vsel %vm104, %v95, 0
    %v112 = vsel %vm104, %v96, 0
    %v115 = vsel %vm104, %v97, 0
    %117 = vmatpush.bf16.msra.mxu0 0
    %118 = vmatpush.bf16.msra.mxu0 0
    %119 = vmatpush.bf16.msra.mxu0 0
    %120 = vmatpush.bf16.msra.mxu0 0
    %121 = vmatpush.bf16.msra.mxu0 0
    %122 = vmatpush.bf16.msra.mxu0 0
    %123 = vmatpush.bf16.msra.mxu0 %v103
    %124 = vmatpush.bf16.msra.mxu0 %v102
    %125 = vmatmul.bf16.gmra.mxu0 %v106
    %v126 = vpop.f32.mrf.mxu0
    %v127 = vadd.f32 0.0, %v126
    %v128 = vpop.f32.mrf.mxu0
    %v129 = vadd.f32 0.0, %v128
    %130 = vmatmul.bf16.gmra.mxu0 %v109
    %v131 = vpop.f32.mrf.mxu0
    %v132 = vadd.f32 0.0, %v131
    %v133 = vpop.f32.mrf.mxu0
    %v134 = vadd.f32 0.0, %v133
    %135 = vmatmul.bf16.gmra.mxu0 %v112
    %v136 = vpop.f32.mrf.mxu0
    %v137 = vadd.f32 0.0, %v136
    %v138 = vpop.f32.mrf.mxu0
    %v139 = vadd.f32 0.0, %v138
    %140 = vmatmul.bf16.gmra.mxu0 %v115
    %v141 = vpop.f32.mrf.mxu0
    %v142 = vadd.f32 0.0, %v141
    %v143 = vpop.f32.mrf.mxu0
    %v144 = vadd.f32 0.0, %v143
    %145 = vdwg.mxu0
    %v146 = vmax.f32 %v127, 0.0
    %v147 = vmax.f32 %v129, 0.0
    %v148 = vmax.f32 %v132, 0.0
    %v149 = vmax.f32 %v134, 0.0
    %v150 = vmax.f32 %v137, 0.0
    %v151 = vmax.f32 %v139, 0.0
    %v152 = vmax.f32 %v142, 0.0
    %v153 = vmax.f32 %v144, 0.0
    %v154 = vpack.c.bf16 %v147, %v146
    %v155 = vpack.c.bf16 %v149, %v148
    %v156 = vpack.c.bf16 %v151, %v150
    %v157 = vpack.c.bf16 %v153, %v152
    %158 = vmatpush.bf16.msra.mxu0 0
    %159 = vmatpush.bf16.msra.mxu0 0
    %160 = vmatpush.bf16.msra.mxu0 0
    %161 = vmatpush.bf16.msra.mxu0 0
    %162 = vmatpush.bf16.msra.mxu0 %v157
    %163 = vmatpush.bf16.msra.mxu0 %v156
    %164 = vmatpush.bf16.msra.mxu0 %v155
    %165 = vmatpush.bf16.msra.mxu0 %v154
    %166 = vmatmul.bf16.gmra.mxu0 %v54
    %v167 = vpop.f32.mrf.mxu0
    %v168 = vadd.f32 0.0, %v167
    %v169 = vpop.f32.mrf.mxu0
    %v170 = vadd.f32 0.0, %v169
    %171 = vmatmul.bf16.gmra.mxu0 %v57
    %v172 = vpop.f32.mrf.mxu0
    %v173 = vadd.f32 0.0, %v172
    %v174 = vpop.f32.mrf.mxu0
    %v175 = vadd.f32 0.0, %v174
    %176 = vmatmul.bf16.gmra.mxu0 %v60
    %v177 = vpop.f32.mrf.mxu0
    %v178 = vadd.f32 0.0, %v177
    %v179 = vpop.f32.mrf.mxu0
    %v180 = vadd.f32 0.0, %v179
    %181 = vmatmul.bf16.gmra.mxu0 %v63
    %v182 = vpop.f32.mrf.mxu0
    %v183 = vadd.f32 0.0, %v182
    %v184 = vpop.f32.mrf.mxu0
    %v185 = vadd.f32 0.0, %v184
    %186 = vdwg.mxu0
    %v187 = vpack.c.bf16 %v170, %v168
    %v188 = vpack.c.bf16 %v175, %v173
    %v189 = vpack.c.bf16 %v180, %v178
    %v190 = vpack.c.bf16 %v185, %v183
    %v191 = vld [vmem:[%s3] sm:$0xff]
    %v192 = vld [vmem:[%s3 + $0x8] sm:$0xff]
    %v193 = vld [vmem:[%s3 + $0x10] sm:$0xff]
    %v194 = vld [vmem:[%s3 + $0x18] sm:$0xff]
    %v195 = vpack.c.bf16 %v192, %v191
    %v196 = vpack.c.bf16 %v194, %v193
    %v198 = vsel %vm104, %v187, 0
    %v201 = vsel %vm104, %v188, 0
    %v204 = vsel %vm104, %v189, 0
    %v207 = vsel %vm104, %v190, 0
    %209 = vmatpush.bf16.msra.mxu0 0
    %210 = vmatpush.bf16.msra.mxu0 0
    %211 = vmatpush.bf16.msra.mxu0 0
    %212 = vmatpush.bf16.msra.mxu0 0
    %213 = vmatpush.bf16.msra.mxu0 0
    %214 = vmatpush.bf16.msra.mxu0 0
    %215 = vmatpush.bf16.msra.mxu0 %v196
    %216 = vmatpush.bf16.msra.mxu0 %v195
    %217 = vmatmul.bf16.gmra.mxu0 %v198
    %v218 = vpop.f32.mrf.mxu0
    %v219 = vadd.f32 0.0, %v218
    %v220 = vpop.f32.mrf.mxu0
    %v221 = vadd.f32 0.0, %v220
    %222 = vmatmul.bf16.gmra.mxu0 %v201
    %v223 = vpop.f32.mrf.mxu0
    %v224 = vadd.f32 0.0, %v223
    %v225 = vpop.f32.mrf.mxu0
    %v226 = vadd.f32 0.0, %v225
    %227 = vmatmul.bf16.gmra.mxu0 %v204
    %v228 = vpop.f32.mrf.mxu0
    %v229 = vadd.f32 0.0, %v228
    %v230 = vpop.f32.mrf.mxu0
    %v231 = vadd.f32 0.0, %v230
    %232 = vmatmul.bf16.gmra.mxu0 %v207
    %v233 = vpop.f32.mrf.mxu0
    %v234 = vadd.f32 0.0, %v233
    %v235 = vpop.f32.mrf.mxu0
    %v236 = vadd.f32 0.0, %v235
    %237 = vdwg.mxu0
    %v238 = vmul.f32 %v219, 1.442695
    %v239 = vpow.pop %v238
    %v240 = vmul.f32 %v221, 1.442695
    %v241 = vpow.pop %v240
    %v242 = vmul.f32 %v224, 1.442695
    %v243 = vpow.pop %v242
    %v244 = vmul.f32 %v226, 1.442695
    %v245 = vpow.pop %v244
    %v246 = vmul.f32 %v229, 1.442695
    %v247 = vpow.pop %v246
    %v248 = vmul.f32 %v231, 1.442695
    %v249 = vpow.pop %v248
    %v250 = vmul.f32 %v234, 1.442695
    %v251 = vpow.pop %v250
    %v252 = vmul.f32 %v236, 1.442695
    %v253 = vpow.pop %v252
    %v254 = vld [vmem:[%s6] sm:$0xff]
    %v255 = vld [vmem:[%s6 + $0x8] sm:$0xff]
    %v256 = vld [vmem:[%s6 + $0x10] sm:$0xff]
    %v257 = vld [vmem:[%s6 + $0x18] sm:$0xff]
    %v258 = vld [vmem:[%s6 + $0x20] sm:$0xff]
    %v259 = vld [vmem:[%s6 + $0x28] sm:$0xff]
    %v260 = vld [vmem:[%s6 + $0x30] sm:$0xff]
    %v261 = vld [vmem:[%s6 + $0x38] sm:$0xff]
    %270 = vrot.lane.b32.xlu0 %v254, 16
    %v271 = vpop.permute.xlu0 %270
    %272 = vrot.lane.b32.xlu0 %v255, 16
    %v273 = vpop.permute.xlu0 %272
    %274 = vrot.lane.b32.xlu0 %v256, 16
    %v275 = vpop.permute.xlu0 %274
    %276 = vrot.lane.b32.xlu0 %v257, 16
    %v277 = vpop.permute.xlu0 %276
    %278 = vrot.lane.b32.xlu0 %v258, 16
    %v279 = vpop.permute.xlu0 %278
    %280 = vrot.lane.b32.xlu0 %v259, 16
    %v281 = vpop.permute.xlu0 %280
    %282 = vrot.lane.b32.xlu0 %v260, 16
    %v283 = vpop.permute.xlu0 %282
    %284 = vrot.lane.b32.xlu0 %v261, 16
    %v285 = vpop.permute.xlu0 %284
    %v294 = vmul.f32 %v239, %v271
    %v295 = vmul.f32 %v241, %v273
    %v296 = vmul.f32 %v243, %v275
    %v297 = vmul.f32 %v245, %v277
    %v298 = vmul.f32 %v247, %v279
    %v299 = vmul.f32 %v249, %v281
    %v300 = vmul.f32 %v251, %v283
    %v301 = vmul.f32 %v253, %v285
    %310 = vrot.lane.b32.xlu0 %v294, 112
    %v311 = vpop.permute.xlu0 %310
    %312 = vrot.lane.b32.xlu0 %v295, 112
    %v313 = vpop.permute.xlu0 %312
    %314 = vrot.lane.b32.xlu0 %v296, 112
    %v315 = vpop.permute.xlu0 %314
    %316 = vrot.lane.b32.xlu0 %v297, 112
    %v317 = vpop.permute.xlu0 %316
    %318 = vrot.lane.b32.xlu0 %v298, 112
    %v319 = vpop.permute.xlu0 %318
    %320 = vrot.lane.b32.xlu0 %v299, 112
    %v321 = vpop.permute.xlu0 %320
    %322 = vrot.lane.b32.xlu0 %v300, 112
    %v323 = vpop.permute.xlu0 %322
    %324 = vrot.lane.b32.xlu0 %v301, 112
    %v325 = vpop.permute.xlu0 %324
    %v334 = vadd.f32 %v219, %v311
    %v335 = vadd.f32 %v221, %v313
    %v336 = vadd.f32 %v224, %v315
    %v337 = vadd.f32 %v226, %v317
    %v338 = vadd.f32 %v229, %v319
    %v339 = vadd.f32 %v231, %v321
    %v340 = vadd.f32 %v234, %v323
    %v341 = vadd.f32 %v236, %v325
    %v342 = vld [vmem:[%s5] sm:$0xff]
    %v343 = vld [vmem:[%s5 + $0x8] sm:$0xff]
    %v344 = vld [vmem:[%s5 + $0x10] sm:$0xff]
    %v345 = vlaneseq
    %v346 = vand.u32 %v345, 127
    %347 = vset.pattern.permute.xlu0 0
    %348 = vperm.xlu0 %347, %v342
    %v349 = vpop.permute.xlu0 %348
    %350 = vset.pattern.permute.xlu0 0
    %351 = vperm.xlu0 %350, %v343
    %v352 = vpop.permute.xlu0 %351
    %353 = vset.pattern.permute.xlu0 0
    %354 = vperm.xlu0 %353, %v344
    %v355 = vpop.permute.xlu0 %354
    %vm356 = vcmp.eq.s32.totalorder %v346, %v349
    %vm357 = vcmp.eq.s32.totalorder %v346, %v352
    %vm358 = vcmp.eq.s32.totalorder %v346, %v355
    %v359 = vsel %vm356, 1, 0
    %v360 = vsel %vm357, 1, 0
    %v361 = vsel %vm358, 1, 0
    %v362 = vcvt.s32.f32 %v359
    %v363 = vcvt.s32.f32 %v360
    %v364 = vcvt.s32.f32 %v361
    %v366 = vsel %vm52, %v362, 0
    %v369 = vsel %vm52, %v363, 0
    %v372 = vsel %vm52, %v364, 0
    %374 = vmatpush.msra.mxu0 0.0
    %375 = vmatpush.msra.mxu0 0.0
    %376 = vmatpush.msra.mxu0 0.0
    %377 = vmatpush.msra.mxu0 0.0
    %378 = vmatpush.msra.mxu0 0.0
    %379 = vmatpush.msra.mxu0 0.0
    %380 = vmatpush.msra.mxu0 0.0
    %381 = vmatpush.msra.mxu0 0.0
    %382 = vmatpush.msra.mxu0 %v341
    %383 = vmatpush.msra.mxu0 %v340
    %384 = vmatpush.msra.mxu0 %v339
    %385 = vmatpush.msra.mxu0 %v338
    %386 = vmatpush.msra.mxu0 %v337
    %387 = vmatpush.msra.mxu0 %v336
    %388 = vmatpush.msra.mxu0 %v335
    %389 = vmatpush.msra.mxu0 %v334
    %390 = vmatmul.f32.gmra.mxu0 %v366
    %v391 = vpop.f32.mrf.mxu0
    %v392 = vadd.f32 0.0, %v391
    %393 = vmatmul.f32.gmra.mxu0 %v369
    %v394 = vpop.f32.mrf.mxu0
    %v395 = vadd.f32 0.0, %v394
    %396 = vmatmul.f32.gmra.mxu0 %v372
    %v397 = vpop.f32.mrf.mxu0
    %v398 = vadd.f32 0.0, %v397
    %399 = vdwg.mxu0
    %v400 = vld [vmem:[%s4] sm:$0x1]
    %v401 = vmul.f32 %v392, %v395
    %v403 = vperm.slane %v400, 0
    %v405 = vmul.f32 %v401, %v403
    %vm406 = vcmask 130048
    %v407 = vsel %vm406, %v405, 0.0
    %408 = vadd.xlane.f32.xlu0 %v407
    %v409 = vpop.xlane.xlu0 %408
    %v410 = vmul.f32 %v392, %v398
    %v411 = vmul.f32 %v410, %v403
    %v412 = vsel %vm406, %v411, 0.0
    %413 = vadd.xlane.f32.xlu0 %v412
    %v414 = vpop.xlane.xlu0 %413
    %v415 = vsub.f32 %v414, %v409
    %v416 = vmax.f32 %v415, 0.0
    %v417 = vand.u32 2147483647, %v415
    %v418 = vsub.f32 0.0, %v417
    %v419 = vmul.f32 %v418, 1.442695
    %v420 = vpow.pop %v419
    %v421 = vadd.f32 %v420, 1.0
    %v422 = vlog2.pop %v421
    %v423 = vmul.f32 %v422, 0.6931472
    %v424 = vadd.f32 %v416, %v423
    %vm425 = vcmask 7168
    %v426 = vsel %vm425, %v424, 0.0
    %427 = vadd.xlane.f32.xlu0 %v426
    %v428 = vpop.xlane.xlu0 %427
    %v429 = vrot.slane %v428, 4
    %v430 = vadd.f32 %v428, %v429
    %v431 = vrot.slane %v430, 2
    %v432 = vadd.f32 %v430, %v431
    %v433 = vrot.slane %v432, 1
    %v434 = vadd.f32 %v432, %v433
    %s435 = vtos %v434
    %v436 = vrcp.pop 8.0
    %v437 = vmul.f32 8.0, %v436
    %v438 = vsub.f32 1.0, %v437
    %v439 = vmul.f32 %v436, %v438
    %v440 = vadd.f32 %v436, %v439
    %vm441 = vweird.f32 %v436
    %v442 = vsel %vm441, %v436, %v440
    %s443 = vtos %v442
    %s444 = smul.f32 %s435, %s443
    %v445 = vmul.f32 %v219, 2.0
    %v446 = vmul.f32 %v221, 2.0
    %v447 = vmul.f32 %v224, 2.0
    %v448 = vmul.f32 %v226, 2.0
    %v449 = vmul.f32 %v229, 2.0
    %v450 = vmul.f32 %v231, 2.0
    %v451 = vmul.f32 %v234, 2.0
    %v452 = vmul.f32 %v236, 2.0
    %v453 = vadd.f32 %v445, 1.0
    %v454 = vadd.f32 %v446, 1.0
    %v455 = vadd.f32 %v447, 1.0
    %v456 = vadd.f32 %v448, 1.0
    %v457 = vadd.f32 %v449, 1.0
    %v458 = vadd.f32 %v450, 1.0
    %v459 = vadd.f32 %v451, 1.0
    %v460 = vadd.f32 %v452, 1.0
    %v461 = vmul.f32 %v219, %v219
    %v462 = vmul.f32 %v221, %v221
    %v463 = vmul.f32 %v224, %v224
    %v464 = vmul.f32 %v226, %v226
    %v465 = vmul.f32 %v229, %v229
    %v466 = vmul.f32 %v231, %v231
    %v467 = vmul.f32 %v234, %v234
    %v468 = vmul.f32 %v236, %v236
    %477 = vrot.lane.b32.xlu0 %v461, 16
    %v478 = vpop.permute.xlu0 %477
    %479 = vrot.lane.b32.xlu0 %v462, 16
    %v480 = vpop.permute.xlu0 %479
    %481 = vrot.lane.b32.xlu0 %v463, 16
    %v482 = vpop.permute.xlu0 %481
    %483 = vrot.lane.b32.xlu0 %v464, 16
    %v484 = vpop.permute.xlu0 %483
    %485 = vrot.lane.b32.xlu0 %v465, 16
    %v486 = vpop.permute.xlu0 %485
    %487 = vrot.lane.b32.xlu0 %v466, 16
    %v488 = vpop.permute.xlu0 %487
    %489 = vrot.lane.b32.xlu0 %v467, 16
    %v490 = vpop.permute.xlu0 %489
    %491 = vrot.lane.b32.xlu0 %v468, 16
    %v492 = vpop.permute.xlu0 %491
    %v501 = vsub.f32 %v453, %v478
    %v502 = vsub.f32 %v454, %v480
    %v503 = vsub.f32 %v455, %v482
    %v504 = vsub.f32 %v456, %v484
    %v505 = vsub.f32 %v457, %v486
    %v506 = vsub.f32 %v458, %v488
    %v507 = vsub.f32 %v459, %v490
    %v508 = vsub.f32 %v460, %v492
    %v509 = vmul.f32 %v445, 1.442695
    %v510 = vpow.pop %v509
    %v511 = vmul.f32 %v446, 1.442695
    %v512 = vpow.pop %v511
    %v513 = vmul.f32 %v447, 1.442695
    %v514 = vpow.pop %v513
    %v515 = vmul.f32 %v448, 1.442695
    %v516 = vpow.pop %v515
    %v517 = vmul.f32 %v449, 1.442695
    %v518 = vpow.pop %v517
    %v519 = vmul.f32 %v450, 1.442695
    %v520 = vpow.pop %v519
    %v521 = vmul.f32 %v451, 1.442695
    %v522 = vpow.pop %v521
    %v523 = vmul.f32 %v452, 1.442695
    %v524 = vpow.pop %v523
    %v525 = vsub.f32 %v501, %v510
    %v526 = vsub.f32 %v502, %v512
    %v527 = vsub.f32 %v503, %v514
    %v528 = vsub.f32 %v504, %v516
    %v529 = vsub.f32 %v505, %v518
    %v530 = vsub.f32 %v506, %v520
    %v531 = vsub.f32 %v507, %v522
    %v532 = vsub.f32 %v508, %v524
    %541 = vrot.lane.b32.xlu0 %v525, 112
    %v542 = vpop.permute.xlu0 %541
    %543 = vrot.lane.b32.xlu0 %v526, 112
    %v544 = vpop.permute.xlu0 %543
    %545 = vrot.lane.b32.xlu0 %v527, 112
    %v546 = vpop.permute.xlu0 %545
    %547 = vrot.lane.b32.xlu0 %v528, 112
    %v548 = vpop.permute.xlu0 %547
    %549 = vrot.lane.b32.xlu0 %v529, 112
    %v550 = vpop.permute.xlu0 %549
    %551 = vrot.lane.b32.xlu0 %v530, 112
    %v552 = vpop.permute.xlu0 %551
    %553 = vrot.lane.b32.xlu0 %v531, 112
    %v554 = vpop.permute.xlu0 %553
    %555 = vrot.lane.b32.xlu0 %v532, 112
    %v556 = vpop.permute.xlu0 %555
    %v565 = vsel %vm406, %v542, 0.0
    %566 = vadd.xlane.f32.xlu0 %v565
    %v567 = vpop.xlane.xlu0 %566
    %v568 = vsel %vm406, %v544, 0.0
    %569 = vadd.xlane.f32.xlu0 %v568
    %v570 = vpop.xlane.xlu0 %569
    %v571 = vsel %vm406, %v546, 0.0
    %572 = vadd.xlane.f32.xlu0 %v571
    %v573 = vpop.xlane.xlu0 %572
    %v574 = vsel %vm406, %v548, 0.0
    %575 = vadd.xlane.f32.xlu0 %v574
    %v576 = vpop.xlane.xlu0 %575
    %v577 = vsel %vm406, %v550, 0.0
    %578 = vadd.xlane.f32.xlu0 %v577
    %v579 = vpop.xlane.xlu0 %578
    %v580 = vsel %vm406, %v552, 0.0
    %581 = vadd.xlane.f32.xlu0 %v580
    %v582 = vpop.xlane.xlu0 %581
    %v583 = vsel %vm406, %v554, 0.0
    %584 = vadd.xlane.f32.xlu0 %v583
    %v585 = vpop.xlane.xlu0 %584
    %v586 = vsel %vm406, %v556, 0.0
    %587 = vadd.xlane.f32.xlu0 %v586
    %v588 = vpop.xlane.xlu0 %587
    %v589 = vsel %vm425, %v567, 0.0
    %v590 = vsel %vm425, %v570, 0.0
    %v591 = vadd.f32 %v589, %v590
    %v592 = vsel %vm425, %v573, 0.0
    %v593 = vadd.f32 %v591, %v592
    %v594 = vsel %vm425, %v576, 0.0
    %v595 = vadd.f32 %v593, %v594
    %v596 = vsel %vm425, %v579, 0.0
    %v597 = vadd.f32 %v595, %v596
    %v598 = vsel %vm425, %v582, 0.0
    %v599 = vadd.f32 %v597, %v598
    %v600 = vsel %vm425, %v585, 0.0
    %v601 = vadd.f32 %v599, %v600
    %v602 = vsel %vm425, %v588, 0.0
    %v603 = vadd.f32 %v601, %v602
    %604 = vadd.xlane.f32.xlu0 %v603
    %v605 = vpop.xlane.xlu0 %604
    %v606 = vrot.slane %v605, 4
    %v607 = vadd.f32 %v605, %v606
    %v608 = vrot.slane %v607, 2
    %v609 = vadd.f32 %v607, %v608
    %v610 = vrot.slane %v609, 1
    %v611 = vadd.f32 %v609, %v610
    %s612 = vtos %v611
    %v613 = vrcp.pop 64.0
    %v614 = vmul.f32 64.0, %v613
    %v615 = vsub.f32 1.0, %v614
    %v616 = vmul.f32 %v613, %v615
    %v617 = vadd.f32 %v613, %v616
    %vm618 = vweird.f32 %v613
    %v619 = vsel %vm618, %v613, %v617
    %s620 = vtos %v619
    %s621 = smul.f32 %s612, %s620
    %s622 = smul.f32 %s621, -0.5
    %s623 = sadd.f32 %s444, %s622
    %v624 = vstv %s623
    %vm625 = vcmask 0
    %626 = vst.msk [vmem:[#allocation2] sm:$0x1] %vm625, %v624
    // Predicated region
    $region30: #{vgae_forward.1} parent=1 // pred_check
      _
    $region31: #{vgae_forward.1} parent=1 // pred_check_branch
      %628 = sbr.rel (0) target = $region33
    $region32: #{vgae_forward.1} parent=1 // pred_region
      %630 = vsyncadd [#allocation3], 0
      %s632 = sshll.u32 [#allocation2], 4
      %s633 = int_to_ptr.vmem [resolvable:$true] %s632
      %s634 = sshll.u32 %s7, 4
      %s635 = int_to_ptr.hbm [resolvable:$true] %s634
      %637 = dma.vmem_to_hbm [thread:$0]  %s633, 16, %s635, [#allocation3]
    $region33: #{vgae_forward.1} parent=1 // pred_fallthru
      _
    // Predicated region
    $region34: #{vgae_forward.1} parent=1 // pred_check
      _
    $region35: #{vgae_forward.1} parent=1 // pred_check_branch
      %639 = sbr.rel (0) target = $region37
    $region36: #{vgae_forward.1} parent=1 // pred_region
      %641 = dma.done [#allocation3], 16
    $region37: #{vgae_forward.1} parent=1 // pred_fallthru
      _
    %642 = vsyncpa [#allocation3], 1

</llo_original>
